<compile_context>
chip_gen: v7x
topology: tpu7x:2x2x1
jax: 0.10.0
libtpu: 0.0.40
codegen_flags: <defaults>
</compile_context>

<pallas_src>
import functools
import math

import jax
import jax.numpy as jnp
from jax.experimental import pallas as pl
from jax.experimental.pallas import tpu as pltpu

VMEM = pltpu.MemorySpace.VMEM
BN_EPS = 1e-5
ROW_TILE = 512                       # M-row tile for gridded matmul kernels
_VMEM_LIMIT = 48 * 1024 * 1024       # scoped VMEM cap (< v7x 64 MiB physical)


def _cparams(n_parallel):
    return pltpu.CompilerParams(
        dimension_semantics=("parallel",) * n_parallel,
        vmem_limit_bytes=_VMEM_LIMIT)


# ----------------------------- in-kernel math ------------------------------

def _sigmoid(x):
    # exp + approx reciprocal both run on the EUP slot (VALU stays free);
    # stable form: never exponentiates a positive argument.
    z = jnp.exp(-jnp.abs(x))
    r = pl.reciprocal(1.0 + z, approx=True)
    return jnp.where(x >= 0, r, z * r)


def _silu(x):
    return x * _sigmoid(x)


# --------------------------- generic matmul kernel --------------------------

def _mm_act_kernel(x_ref, w_ref, b_ref, o_ref, *, act):
    x = x_ref[...].astype(jnp.bfloat16)          # bf16 MXU path, f32 accumulate
    y = jnp.dot(x, w_ref[...], preferred_element_type=jnp.float32) + b_ref[...]
    if act == "silu":
        y = _silu(y)
    o_ref[...] = y.astype(o_ref.dtype)


def pallas_matmul(x, w, b, act="none", out_dtype=jnp.float32):
    """act(x @ w + b); x:(M,K), w:(K,N) bf16, b:(N,) f32 -> (M,N) out_dtype."""
    M, K = x.shape
    N = w.shape[1]
    if M > ROW_TILE:
        Mp = pl.cdiv(M, ROW_TILE) * ROW_TILE
        tm = ROW_TILE
        if Mp != M:
            x = jnp.pad(x, ((0, Mp - M), (0, 0)))
    else:
        Mp = tm = M
    out = pl.pallas_call(
        functools.partial(_mm_act_kernel, act=act),
        out_shape=jax.ShapeDtypeStruct((Mp, N), out_dtype),
        grid=(Mp // tm,),
        in_specs=[pl.BlockSpec((tm, K), lambda i: (i, 0)),
                  pl.BlockSpec((K, N), lambda i: (0, 0)),
                  pl.BlockSpec((1, N), lambda i: (0, 0))],
        out_specs=pl.BlockSpec((tm, N), lambda i: (i, 0)),
        compiler_params=_cparams(1),
    )(x, w, b.reshape(1, N))
    return out[:M] if Mp != M else out


# -------------------- depthwise conv + SiLU + SE-pool kernel ----------------

def _dw_silu_mean_kernel(x_ref, w_ref, b_ref, y_ref, m_ref, *,
                         k, stride, Ho, Wo, Hq):
    C = x_ref.shape[-1]
    acc = jnp.zeros((Ho, Wo, C), jnp.float32)
    bias = b_ref[0]
    # Static unroll over the k*k window; every tap is a unit-stride static
    # slice of the VMEM-resident (phase-split) activation block.
    for kh in range(k):
        for kw in range(k):
            base = ((kh % stride) * stride + (kw % stride)) * Hq
            oh, ow = kh // stride, kw // stride
            tap = x_ref[0, base + oh: base + oh + Ho, ow: ow + Wo, :]
            acc = acc + tap.astype(jnp.float32) * w_ref[kh * k + kw]
    y = _silu(acc + bias)
    y_ref[0] = y.astype(y_ref.dtype)
    # SE squeeze (global average pool) fused into the depthwise epilogue so the
    # expanded activation is never re-read from HBM (mean taken in f32).
    m = jnp.mean(y, axis=0, keepdims=True)           # (1, Wo, C)
    m_ref[...] = jnp.mean(m, axis=1, keepdims=True)  # (1, 1, C)


def _build_dw_phases(x, k, stride):
    """Pad + (for stride 2) phase-split so every tap is a static unit-stride
    slice of a single block (replaces the k*k im2col patch stack in HBM)."""
    N, H, W, C = x.shape
    p = (k - 1) // 2
    s = stride
    Ho = (H + 2 * p - k) // s + 1
    Wo = (W + 2 * p - k) // s + 1
    Hq = Ho + (k - 1) // s
    Wq = Wo + (k - 1) // s
    xp = jnp.pad(x, ((0, 0), (p, p), (p, p), (0, 0)))
    planes = []
    for ph in range(s):
        for pw in range(s):
            pln = xp[:, ph::s, pw::s, :][:, :Hq, :Wq, :]
            pad_h = Hq - pln.shape[1]
            pad_w = Wq - pln.shape[2]
            if pad_h or pad_w:
                pln = jnp.pad(pln, ((0, 0), (0, pad_h), (0, pad_w), (0, 0)))
            planes.append(pln)
    phases = planes[0] if len(planes) == 1 else jnp.concatenate(planes, axis=1)
    return phases, Ho, Wo, Hq, Wq


def pallas_depthwise_silu_mean(x, w, b, k, stride):
    """Depthwise kxk conv (+BN+SiLU) and its HW-mean, gridded over images.

    Returns the activation in bf16 (feeds the bf16 MXU project matmul) and the
    SE pooled squeeze in f32."""
    N, H, W, C = x.shape
    phases, Ho, Wo, Hq, Wq = _build_dw_phases(x, k, stride)
    SH = phases.shape[1]
    kern = functools.partial(_dw_silu_mean_kernel, k=k, stride=stride,
                             Ho=Ho, Wo=Wo, Hq=Hq)
    y, pooled = pl.pallas_call(
        kern,
        out_shape=(jax.ShapeDtypeStruct((N, Ho, Wo, C), jnp.bfloat16),
                   jax.ShapeDtypeStruct((N, 1, C), jnp.float32)),
        grid=(N,),
        in_specs=[pl.BlockSpec((1, SH, Wq, C), lambda n: (n, 0, 0, 0)),
                  pl.BlockSpec((k * k, 1, C), lambda n: (0, 0, 0)),
                  pl.BlockSpec((1, 1, C), lambda n: (0, 0, 0))],
        out_specs=(pl.BlockSpec((1, Ho, Wo, C), lambda n: (n, 0, 0, 0)),
                   pl.BlockSpec((1, 1, C), lambda n: (n, 0, 0))),
        compiler_params=_cparams(1),
    )(phases, w.reshape(k * k, 1, C), b.reshape(1, 1, C))
    return y, pooled.reshape(N, C)


# ------------------------------- SE gate kernel ------------------------------

def _se_gate_kernel(p_ref, w1_ref, b1_ref, w2_ref, b2_ref, o_ref):
    h = jnp.dot(p_ref[...], w1_ref[...],
                preferred_element_type=jnp.float32) + b1_ref[...]
    h = _silu(h)
    g = jnp.dot(h, w2_ref[...],
                preferred_element_type=jnp.float32) + b2_ref[...]
    o_ref[...] = _sigmoid(g)


def pallas_se_gate(pooled, se_params):
    w1, b1, w2, b2 = se_params
    N, C = pooled.shape
    cse = w1.shape[1]
    return pl.pallas_call(
        _se_gate_kernel,
        out_shape=jax.ShapeDtypeStruct((N, C), jnp.float32),
        in_specs=[pl.BlockSpec(memory_space=VMEM)] * 5,
        out_specs=pl.BlockSpec(memory_space=VMEM),
    )(pooled, w1, b1.reshape(1, cse), w2, b2.reshape(1, C))


# ---------------- fused SE-scale + project conv + residual kernel -----------

def _proj_kernel(x_ref, g_ref, w_ref, b_ref, o_ref):
    xg = (x_ref[0] * g_ref[0]).astype(jnp.bfloat16)        # SE gate fused
    o_ref[0] = jnp.dot(xg, w_ref[...],
                       preferred_element_type=jnp.float32) + b_ref[...]


def _proj_res_kernel(x_ref, g_ref, w_ref, b_ref, r_ref, o_ref):
    xg = (x_ref[0] * g_ref[0]).astype(jnp.bfloat16)        # SE gate fused
    y = jnp.dot(xg, w_ref[...],
                preferred_element_type=jnp.float32) + b_ref[...]
    o_ref[0] = y + r_ref[0]                                # residual fused


def pallas_project(x, gate, w, b, residual=None):
    """(x * gate) @ w + b (+ residual); grid = (image, row-tile)."""
    N, Ho, Wo, Ce = x.shape
    Co = w.shape[1]
    HW = Ho * Wo
    x3 = x.reshape(N, HW, Ce)
    g3 = gate.reshape(N, 1, Ce)
    if HW > ROW_TILE:
        HWp = pl.cdiv(HW, ROW_TILE) * ROW_TILE
        tr = ROW_TILE
    else:
        HWp = tr = HW
    if HWp != HW:
        x3 = jnp.pad(x3, ((0, 0), (0, HWp - HW), (0, 0)))
    grid = (N, HWp // tr)
    x_spec = pl.BlockSpec((1, tr, Ce), lambda n, t: (n, t, 0))
    g_spec = pl.BlockSpec((1, 1, Ce), lambda n, t: (n, 0, 0))
    w_spec = pl.BlockSpec((Ce, Co), lambda n, t: (0, 0))
    b_spec = pl.BlockSpec((1, Co), lambda n, t: (0, 0))
    o_spec = pl.BlockSpec((1, tr, Co), lambda n, t: (n, t, 0))
    if residual is not None:
        r3 = residual.reshape(N, HW, Co)
        if HWp != HW:
            r3 = jnp.pad(r3, ((0, 0), (0, HWp - HW), (0, 0)))
        out = pl.pallas_call(
            _proj_res_kernel,
            out_shape=jax.ShapeDtypeStruct((N, HWp, Co), jnp.float32),
            grid=grid,
            in_specs=[x_spec, g_spec, w_spec, b_spec, o_spec],
            out_specs=o_spec,
            compiler_params=_cparams(2),
        )(x3, g3, w, b.reshape(1, Co), r3)
    else:
        out = pl.pallas_call(
            _proj_kernel,
            out_shape=jax.ShapeDtypeStruct((N, HWp, Co), jnp.float32),
            grid=grid,
            in_specs=[x_spec, g_spec, w_spec, b_spec],
            out_specs=o_spec,
            compiler_params=_cparams(2),
        )(x3, g3, w, b.reshape(1, Co))
    if HWp != HW:
        out = out[:, :HW]
    return out.reshape(N, Ho, Wo, Co)


# ------------------- fused head conv + SiLU + global pool -------------------

def _head_pool_kernel(x_ref, w_ref, b_ref, o_ref):
    x = x_ref[0].astype(jnp.bfloat16)
    y = _silu(jnp.dot(x, w_ref[...],
                      preferred_element_type=jnp.float32) + b_ref[...])
    o_ref[0] = jnp.mean(y, axis=0, keepdims=True)   # avg-pool fused: (1, Cout)


def pallas_head_pool(x, w, b):
    N, H, W, C = x.shape
    HW = H * W
    Co = w.shape[1]
    out = pl.pallas_call(
        _head_pool_kernel,
        out_shape=jax.ShapeDtypeStruct((N, 1, Co), jnp.float32),
        grid=(N,),
        in_specs=[pl.BlockSpec((1, HW, C), lambda n: (n, 0, 0)),
                  pl.BlockSpec((C, Co), lambda n: (0, 0)),
                  pl.BlockSpec((1, Co), lambda n: (0, 0))],
        out_specs=pl.BlockSpec((1, 1, Co), lambda n: (n, 0, 0)),
        compiler_params=_cparams(1),
    )(x.reshape(N, HW, C), w, b.reshape(1, Co))
    return out.reshape(N, Co)


# ------------------------------ JAX glue -----------------------------------

def extract_patches(x, k, stride, pad):
    """Stem-only im2col (K = 9*3 = 27 is tiny): (k*k, N*Ho*Wo, C)."""
    N, H, W, C = x.shape
    xp = jnp.pad(x, ((0, 0), (pad, pad), (pad, pad), (0, 0)))
    Ho = (H + 2 * pad - k) // stride + 1
    Wo = (W + 2 * pad - k) // stride + 1
    taps = []
    for kh in range(k):
        for kw in range(k):
            s = xp[:, kh:kh + stride * Ho:stride, kw:kw + stride * Wo:stride, :]
            taps.append(s.reshape(N * Ho * Wo, C))
    return jnp.stack(taps, axis=0), Ho, Wo


# --------------------------- parameter creation -----------------------------
# Deterministic synthetic weights (torchvision EfficientNet-B0 shapes).
# TODO(synk): original module loads efficientnet_b0_IMAGENET1K_V1.pth; weights
# here are synthetic deterministic initialization instead of a checkpoint.

class ParamGen:
    def __init__(self, seed=0):
        self._key = jax.random.PRNGKey(seed)

    def take(self, shape, scale=1.0):
        self._key, sub = jax.random.split(self._key)
        return jax.random.normal(sub, shape, jnp.float32) * scale


def bn_fold(gen, c):
    gamma = 1.0 + 0.1 * gen.take((c,))
    beta = 0.1 * gen.take((c,))
    mean = 0.1 * gen.take((c,))
    var = jnp.ones((c,), jnp.float32)
    scale = gamma / jnp.sqrt(var + BN_EPS)
    bias = beta - mean * scale
    return scale, bias


def make_pw(gen, cin, cout):            # 1x1 conv + folded BN (bf16 MXU weight)
    w = gen.take((cin, cout), 1.0 / math.sqrt(cin))
    s, b = bn_fold(gen, cout)
    return (w * s[None, :]).astype(jnp.bfloat16), b


def make_dw(gen, c, k):                 # depthwise kxk conv + folded BN (f32 VPU)
    w = gen.take((k * k, c), 1.0 / math.sqrt(k * k))
    s, b = bn_fold(gen, c)
    return w * s[None, :], b


def make_full_conv(gen, cin, cout, k):  # dense kxk conv (im2col) + folded BN
    w = gen.take((k * k * cin, cout), 1.0 / math.sqrt(k * k * cin))
    s, b = bn_fold(gen, cout)
    return (w * s[None, :]).astype(jnp.bfloat16), b


def make_se(gen, c_exp, c_se):          # SE: two 1x1 convs with bias (tiny, f32)
    w1 = gen.take((c_exp, c_se), 1.0 / math.sqrt(c_exp))
    b1 = 0.01 * gen.take((c_se,))
    w2 = gen.take((c_se, c_exp), 1.0 / math.sqrt(c_se))
    b2 = 0.01 * gen.take((c_exp,))
    return (w1, b1, w2, b2)


# (expand_ratio, kernel, stride, c_in, c_out, num_layers) -- EfficientNet-B0
MBCONV_CFG = [
    (1, 3, 1, 32, 16, 1),
    (6, 3, 2, 16, 24, 2),
    (6, 5, 2, 24, 40, 2),
    (6, 3, 2, 40, 80, 3),
    (6, 5, 1, 80, 112, 3),
    (6, 5, 2, 112, 192, 4),
    (6, 3, 1, 192, 320, 1),
]


def build_params(nclasses, seed=0):
    gen = ParamGen(seed)
    params = {"stem": make_full_conv(gen, 3, 32, 3), "blocks": []}
    for expand, k, stride, cin, cout, layers in MBCONV_CFG:
        for li in range(layers):
            bcin = cin if li == 0 else cout
            bstride = stride if li == 0 else 1
            cexp = bcin * expand
            cse = max(1, bcin // 4)
            blk = {"cin": bcin, "cout": cout, "k": k, "stride": bstride,
                   "expand": expand}
            if expand != 1:
                blk["expand_conv"] = make_pw(gen, bcin, cexp)
            blk["dw"] = make_dw(gen, cexp, k)
            blk["se"] = make_se(gen, cexp, cse)
            blk["project"] = make_pw(gen, cexp, cout)
            params["blocks"].append(blk)
    params["head"] = make_pw(gen, 320, 1280)
    wc = gen.take((1280, nclasses), 1.0 / math.sqrt(1280))
    bc = 0.01 * gen.take((nclasses,))
    params["classifier"] = (wc.astype(jnp.bfloat16), bc)
    return params


# ------------------------------ forward pass --------------------------------

def pointwise(x, w, b, act, out_dtype=jnp.float32):
    N, H, W, C = x.shape
    y = pallas_matmul(x.reshape(N * H * W, C), w, b, act, out_dtype=out_dtype)
    return y.reshape(N, H, W, -1)


def mbconv(x, blk):
    inp = x
    if blk["expand"] != 1:
        # Expanded activation is the widest tensor in the block; store it bf16.
        x = pointwise(x, *blk["expand_conv"], "silu", out_dtype=jnp.bfloat16)
    # depthwise + BN + SiLU, with the SE squeeze fused into its epilogue
    x, pooled = pallas_depthwise_silu_mean(x, *blk["dw"], blk["k"], blk["stride"])
    gate = pallas_se_gate(pooled, blk["se"])
    use_res = blk["stride"] == 1 and blk["cin"] == blk["cout"]
    # TODO(synk): stochastic depth is identity at inference time.
    res = inp if use_res else None
    return pallas_project(x, gate, *blk["project"], residual=res)


def efficientnet_b0_forward(x_nchw, params):
    # Accepts NCHW like the PyTorch module; transposes to NHWC internally.
    x = jnp.transpose(x_nchw, (0, 2, 3, 1)).astype(jnp.float32)
    N = x.shape[0]
    # Stem: 3x3 stride-2 conv via (tiny) im2col + Pallas matmul, BN + SiLU.
    patches, Ho, Wo = extract_patches(x, 3, 2, 1)                  # (9, P, 3)
    P = patches.shape[1]
    patches = jnp.transpose(patches, (1, 0, 2)).reshape(P, 9 * 3)  # (P, 27)
    ws, bs = params["stem"]
    x = pallas_matmul(patches, ws, bs, "silu",
                      out_dtype=jnp.bfloat16).reshape(N, Ho, Wo, 32)
    # 16 MBConv blocks.  Block outputs (residual chain) stay f32; the wide
    # expanded / depthwise activations inside each block travel as bf16.
    for blk in params["blocks"]:
        x = mbconv(x, blk)
    # Head 1x1 conv 320 -> 1280 (BN + SiLU) fused with the global average pool.
    wh, bh = params["head"]
    pooled = pallas_head_pool(x, wh, bh)                           # (N, 1280)
    # TODO(synk): Dropout(p=0.2) is identity in eval mode; omitted.
    wc, bc = params["classifier"]
    return pallas_matmul(pooled, wc, bc, "none")


if __name__ == "__main__":
    nclasses = 10
    key = jax.random.PRNGKey(0)
    x = jax.random.normal(key, (2, 3, 16, 16), jnp.float32)   # NCHW like PyTorch
    params = build_params(nclasses, seed=0)
    logits = efficientnet_b0_forward(x, params)
    logits = jax.block_until_ready(logits)
    assert logits.shape == (2, nclasses)
    assert bool(jnp.all(jnp.isfinite(logits)))
    print("KERNEL_OK")
</pallas_src>

<mosaic_0001>
module attributes {stable_mosaic.version = 11 : i64} {
  func.func @_mm_act_kernel(%arg0: i32, %arg1: memref<128x27xf32, #tpu.memory_space<vmem>>, %arg2: memref<27x32xbf16, #tpu.memory_space<vmem>>, %arg3: memref<1x32xf32, #tpu.memory_space<vmem>>, %arg4: memref<128x32xbf16, #tpu.memory_space<vmem>>) attributes {dimension_semantics = [#tpu.dimension_semantics<parallel>], iteration_bounds = array<i64: 1>, scalar_prefetch = 0 : i64, scratch_operands = 0 : i64, tpu.core_type = #tpu.core_type<tc>, window_params = [{transform_indices = @transform_0, window_bounds = array<i64: 128, 27>}, {pipeline_mode = #tpu.pipeline_mode<synchronous>, transform_indices = @transform_1, window_bounds = array<i64: 27, 32>}, {pipeline_mode = #tpu.pipeline_mode<synchronous>, transform_indices = @transform_2, window_bounds = array<i64: 1, 32>}, {transform_indices = @transform_3, window_bounds = array<i64: 128, 32>}]} {
    %c0 = arith.constant 0 : index
    %c0_0 = arith.constant 0 : index
    %0 = vector.load %arg1[%c0, %c0_0] : memref<128x27xf32, #tpu.memory_space<vmem>>, vector<128x27xf32>
    %1 = arith.truncf %0 : vector<128x27xf32> to vector<128x27xbf16>
    %c0_1 = arith.constant 0 : index
    %c0_2 = arith.constant 0 : index
    %2 = vector.load %arg2[%c0_1, %c0_2] : memref<27x32xbf16, #tpu.memory_space<vmem>>, vector<27x32xbf16>
    %cst = arith.constant dense<0.000000e+00> : vector<128x32xf32>
    %3 = tpu.matmul %1, %2, %cst {dimension_numbers = #tpu.dot_dimension_numbers<[1], [0], [0], [1], [0, 0, 1, 1], [], []>} : vector<128x27xbf16>, vector<27x32xbf16>, vector<128x32xf32> -> vector<128x32xf32>
    %c0_3 = arith.constant 0 : index
    %c0_4 = arith.constant 0 : index
    %4 = vector.load %arg3[%c0_3, %c0_4] : memref<1x32xf32, #tpu.memory_space<vmem>>, vector<1x32xf32>
    %5 = vector.broadcast %4 : vector<1x32xf32> to vector<128x32xf32>
    %6 = arith.addf %3, %5 : vector<128x32xf32>
    %7 = math.absf %6 : vector<128x32xf32>
    %cst_5 = arith.constant 0.000000e+00 : f32
    %8 = vector.broadcast %cst_5 : f32 to vector<128x32xf32>
    %9 = arith.subf %8, %7 : vector<128x32xf32>
    %10 = math.exp %9 : vector<128x32xf32>
    %cst_6 = arith.constant 1.000000e+00 : f32
    %11 = vector.broadcast %cst_6 : f32 to vector<128x32xf32>
    %12 = arith.addf %11, %10 : vector<128x32xf32>
    %13 = tpu.reciprocal %12 {approx = true} : vector<128x32xf32> -> vector<128x32xf32>
    %cst_7 = arith.constant 0.000000e+00 : f32
    %14 = vector.broadcast %cst_7 : f32 to vector<128x32xf32>
    %15 = arith.cmpf oge, %6, %14 : vector<128x32xf32>
    %16 = arith.mulf %10, %13 : vector<128x32xf32>
    %17 = arith.select %15, %13, %16 : vector<128x32xi1>, vector<128x32xf32>
    %18 = arith.mulf %6, %17 : vector<128x32xf32>
    %19 = arith.truncf %18 : vector<128x32xf32> to vector<128x32xbf16>
    %c0_8 = arith.constant 0 : index
    %c0_9 = arith.constant 0 : index
    %20 = vector.load %arg4[%c0_8, %c0_9] : memref<128x32xbf16, #tpu.memory_space<vmem>>, vector<128x32xbf16>
    tpu.vector_store %arg4[%c0_8, %c0_9], %19 {strides = array<i32>} : memref<128x32xbf16, #tpu.memory_space<vmem>>, vector<128x32xbf16>,
    return
  }
  func.func @transform_0(%arg0: i32) -> (i32, i32) {
    %c0_i32 = arith.constant 0 : i32
    %c0_i32_0 = arith.constant 0 : i32
    return %arg0, %c0_i32 : i32, i32
  }
  func.func @transform_1(%arg0: i32) -> (i32, i32) {
    %c0_i32 = arith.constant 0 : i32
    %c0_i32_0 = arith.constant 0 : i32
    %c0_i32_1 = arith.constant 0 : i32
    return %c0_i32, %c0_i32_0 : i32, i32
  }
  func.func @transform_2(%arg0: i32) -> (i32, i32) {
    %c0_i32 = arith.constant 0 : i32
    %c0_i32_0 = arith.constant 0 : i32
    %c0_i32_1 = arith.constant 0 : i32
    return %c0_i32, %c0_i32_0 : i32, i32
  }
  func.func @transform_3(%arg0: i32) -> (i32, i32) {
    %c0_i32 = arith.constant 0 : i32
    %c0_i32_0 = arith.constant 0 : i32
    return %arg0, %c0_i32 : i32, i32
  }
}

</mosaic_0001>

<llo_original>
// kernel: tpu_custom_call.1
$region0: #{tpu_custom_call.1}
  #allocation0 [shape = 'u32[]', space=smem, size = 0x4, offset = 0x4, fixed_abs, tag = 'smem constant byte address 0x4 - core index']
  #allocation1 [shape = 'u32[144,128]{1,0:T(1,128)}', space=vmem, size = 0x12000, scoped, tag = 'internal scratch']
  %s0 = inlined_call_operand.vmem [shape: f32[128,27], index: 0, kind: input, shape index: {}]
  %s1 = inlined_call_operand.vmem [shape: bf16[27,32], index: 1, kind: input, shape index: {}]
  %s2 = inlined_call_operand.vmem [shape: f32[1,32], index: 2, kind: input, shape index: {}]
  %s3 = inlined_call_operand.vmem [shape: bf16[128,32], index: 3, kind: output, shape index: {}]
  %s4 = sld [smem:[#allocation0]]
  $region22: #{tpu_custom_call.1} parent=0
    _
  %s6 = ssub.s32 1, %s4
  %s7 = scalar_select 0, %s6, %s4
  // Predicated region
  $region2: #{tpu_custom_call.1} parent=0 // pred_check
    _
  $region3: #{tpu_custom_call.1} parent=0 // pred_check_branch
    %9 = sbr.rel (0) target = $region5
  $region4: #{tpu_custom_call.1} parent=0 // pred_region
    _
  $region5: #{tpu_custom_call.1} parent=0 // pred_fallthru
    _
  // Predicated region
  $region6: #{tpu_custom_call.1} parent=0 // pred_check
    _
  $region7: #{tpu_custom_call.1} parent=0 // pred_check_branch
    %11 = sbr.rel (0) target = $region9
  $region8: #{tpu_custom_call.1} parent=0 // pred_region
    _
  $region9: #{tpu_custom_call.1} parent=0 // pred_fallthru
    _
  // Predicated region
  $region10: #{tpu_custom_call.1} parent=0 // pred_check
    _
  $region11: #{tpu_custom_call.1} parent=0 // pred_check_branch
    %13 = sbr.rel (0) target = $region13
  $region12: #{tpu_custom_call.1} parent=0 // pred_region
    _
  $region13: #{tpu_custom_call.1} parent=0 // pred_fallthru
    _
  %v15 = vld [vmem:[%s0] sm:$0xff]
  %v16 = vld [vmem:[%s0 + $0x8] sm:$0xff]
  %v17 = vld [vmem:[%s0 + $0x10] sm:$0xff]
  %v18 = vld [vmem:[%s0 + $0x18] sm:$0xff]
  %v19 = vld [vmem:[%s0 + $0x20] sm:$0xff]
  %v20 = vld [vmem:[%s0 + $0x28] sm:$0xff]
  %v21 = vld [vmem:[%s0 + $0x30] sm:$0xff]
  %v22 = vld [vmem:[%s0 + $0x38] sm:$0xff]
  %v23 = vld [vmem:[%s0 + $0x40] sm:$0xff]
  %v24 = vld [vmem:[%s0 + $0x48] sm:$0xff]
  %v25 = vld [vmem:[%s0 + $0x50] sm:$0xff]
  %v26 = vld [vmem:[%s0 + $0x58] sm:$0xff]
  %v27 = vld [vmem:[%s0 + $0x60] sm:$0xff]
  %v28 = vld [vmem:[%s0 + $0x68] sm:$0xff]
  %v29 = vld [vmem:[%s0 + $0x70] sm:$0xff]
  %v30 = vld [vmem:[%s0 + $0x78] sm:$0xff]
  %v31 = vpack.c.bf16 %v16, %v15
  %v32 = vpack.c.bf16 %v18, %v17
  %v33 = vpack.c.bf16 %v20, %v19
  %v34 = vpack.c.bf16 %v22, %v21
  %v35 = vpack.c.bf16 %v24, %v23
  %v36 = vpack.c.bf16 %v26, %v25
  %v37 = vpack.c.bf16 %v28, %v27
  %v38 = vpack.c.bf16 %v30, %v29
  %v39 = vld [vmem:[%s1] sm:$0xf]
  %v40 = vld [vmem:[%s1 + $0x4] sm:$0xf]
  %v41 = vld [vmem:[%s1 + $0x8] sm:$0xf]
  %v42 = vld [vmem:[%s1 + $0xc] sm:$0x3]
  %v43 = vld [vmem:[%s2] sm:$0x1]
  %v45 = vlaneseq
  %v46 = vshrl.u32 %v45, 7
  %v47 = vsub.s32 0, %v46
  %v48 = vrot.slane %v43, %v47
  %v54 = vunpack.c.l.b16 %v39
  %v55 = vunpack.c.l.b16 %v40
  %v56 = vunpack.c.l.b16 %v41
  %v57 = vunpack.c.l.b16 %v42
  %v58 = vpack.c.b16 %v55, %v54
  %v59 = vpack.c.b16 %v57, %v56
  %vm61 = vcmask 220160
  %v63 = vsel %vm61, %v31, 0
  %v66 = vsel %vm61, %v32, 0
  %v69 = vsel %vm61, %v33, 0
  %v72 = vsel %vm61, %v34, 0
  %v75 = vsel %vm61, %v35, 0
  %v78 = vsel %vm61, %v36, 0
  %v81 = vsel %vm61, %v37, 0
  %v84 = vsel %vm61, %v38, 0
  %vm86 = vcmask 1044480
  %vm87 = vcmask 1045504
  %v88 = vsel %vm86, 4294967295, 65535
  %v89 = vsel %vm87, %v88, 0
  %v91 = vand.u32 %v59, %v89
  %93 = vmatprep.subr.bf16.mxu0 0
  %94 = vmatpush1.bf16.msra.mxu0 %v58
  %95 = vmatprep.subr.bf16.mxu0 0
  %96 = vmatpush1.bf16.msra.mxu0 %v91
  %97 = vmatprep.subr.bf16.mxu0 0
  %98 = vmatpush1.bf16.msra.mxu0 0
  %99 = vmatprep.subr.bf16.mxu0 0
  %100 = vmatpush1.bf16.msra.mxu0 0
  %101 = vmatprep.subr.bf16.mxu0 0
  %102 = vmatpush1.bf16.msra.mxu0 0
  %103 = vmatprep.subr.bf16.mxu0 0
  %104 = vmatpush1.bf16.msra.mxu0 0
  %105 = vmatprep.subr.bf16.mxu0 0
  %106 = vmatpush1.bf16.msra.mxu0 0
  %107 = vmatprep.subr.bf16.mxu0 0
  %108 = vmatpush1.bf16.msra.mxu0 0
  %109 = vmatprep.subr.bf16.mxu0 0
  %110 = vmatpush1.bf16.msra.mxu0 0
  %111 = vmatprep.subr.bf16.mxu0 0
  %112 = vmatpush1.bf16.msra.mxu0 0
  %113 = vmatprep.subr.bf16.mxu0 0
  %114 = vmatpush1.bf16.msra.mxu0 0
  %115 = vmatprep.subr.bf16.mxu0 0
  %116 = vmatpush1.bf16.msra.mxu0 0
  %117 = vmatprep.subr.bf16.mxu0 0
  %118 = vmatpush1.bf16.msra.mxu0 0
  %119 = vmatprep.subr.bf16.mxu0 0
  %120 = vmatpush1.bf16.msra.mxu0 0
  %121 = vmatprep.subr.bf16.mxu0 0
  %122 = vmatpush1.bf16.msra.mxu0 0
  %123 = vmatprep.subr.bf16.mxu0 0
  %124 = vmatpush1.bf16.msra.mxu0 0
  %125 = vmatprep.mubr.bf16.mxu0 0
  %126 = vmatmul.mubr.bf16.gmra.mrb[0].mxu0 %v63
  %v127 = vpop.f32.mrb[0].mxu0
  %v128 = vadd.f32 %v48, %v127
  %v129 = vpop.f32.mrb[0].mxu0
  %v130 = vpop.f32.mrb[0].mxu0
  %v131 = vadd.f32 %v48, %v130
  %v132 = vpop.f32.mrb[0].mxu0
  %133 = vmatprep.mubr.bf16.mxu0 0
  %134 = vmatmul.mubr.bf16.gmra.mrb[0].mxu0 %v66
  %v135 = vpop.f32.mrb[0].mxu0
  %v136 = vadd.f32 %v48, %v135
  %v137 = vpop.f32.mrb[0].mxu0
  %v138 = vpop.f32.mrb[0].mxu0
  %v139 = vadd.f32 %v48, %v138
  %v140 = vpop.f32.mrb[0].mxu0
  %141 = vmatprep.mubr.bf16.mxu0 0
  %142 = vmatmul.mubr.bf16.gmra.mrb[0].mxu0 %v69
  %v143 = vpop.f32.mrb[0].mxu0
  %v144 = vadd.f32 %v48, %v143
  %v145 = vpop.f32.mrb[0].mxu0
  %v146 = vpop.f32.mrb[0].mxu0
  %v147 = vadd.f32 %v48, %v146
  %v148 = vpop.f32.mrb[0].mxu0
  %149 = vmatprep.mubr.bf16.mxu0 0
  %150 = vmatmul.mubr.bf16.gmra.mrb[0].mxu0 %v72
  %v151 = vpop.f32.mrb[0].mxu0
  %v152 = vadd.f32 %v48, %v151
  %v153 = vpop.f32.mrb[0].mxu0
  %v154 = vpop.f32.mrb[0].mxu0
  %v155 = vadd.f32 %v48, %v154
  %v156 = vpop.f32.mrb[0].mxu0
  %157 = vmatprep.mubr.bf16.mxu0 0
  %158 = vmatmul.mubr.bf16.gmra.mrb[0].mxu0 %v75
  %v159 = vpop.f32.mrb[0].mxu0
  %v160 = vadd.f32 %v48, %v159
  %v161 = vpop.f32.mrb[0].mxu0
  %v162 = vpop.f32.mrb[0].mxu0
  %v163 = vadd.f32 %v48, %v162
  %v164 = vpop.f32.mrb[0].mxu0
  %165 = vmatprep.mubr.bf16.mxu0 0
  %166 = vmatmul.mubr.bf16.gmra.mrb[0].mxu0 %v78
  %v167 = vpop.f32.mrb[0].mxu0
  %v168 = vadd.f32 %v48, %v167
  %v169 = vpop.f32.mrb[0].mxu0
  %v170 = vpop.f32.mrb[0].mxu0
  %v171 = vadd.f32 %v48, %v170
  %v172 = vpop.f32.mrb[0].mxu0
  %173 = vmatprep.mubr.bf16.mxu0 0
  %174 = vmatmul.mubr.bf16.gmra.mrb[0].mxu0 %v81
  %v175 = vpop.f32.mrb[0].mxu0
  %v176 = vadd.f32 %v48, %v175
  %v177 = vpop.f32.mrb[0].mxu0
  %v178 = vpop.f32.mrb[0].mxu0
  %v179 = vadd.f32 %v48, %v178
  %v180 = vpop.f32.mrb[0].mxu0
  %181 = vmatprep.mubr.bf16.mxu0 0
  %182 = vmatmul.mubr.bf16.gmra.mrb[0].mxu0 %v84
  %v183 = vpop.f32.mrb[0].mxu0
  %v184 = vadd.f32 %v48, %v183
  %v185 = vpop.f32.mrb[0].mxu0
  %v186 = vpop.f32.mrb[0].mxu0
  %v187 = vadd.f32 %v48, %v186
  %v188 = vpop.f32.mrb[0].mxu0
  %189 = vdwg.mxu0
  %v190 = vand.u32 2147483647, %v128
  %v191 = vand.u32 2147483647, %v131
  %v192 = vand.u32 2147483647, %v136
  %v193 = vand.u32 2147483647, %v139
  %v194 = vand.u32 2147483647, %v144
  %v195 = vand.u32 2147483647, %v147
  %v196 = vand.u32 2147483647, %v152
  %v197 = vand.u32 2147483647, %v155
  %v198 = vand.u32 2147483647, %v160
  %v199 = vand.u32 2147483647, %v163
  %v200 = vand.u32 2147483647, %v168
  %v201 = vand.u32 2147483647, %v171
  %v202 = vand.u32 2147483647, %v176
  %v203 = vand.u32 2147483647, %v179
  %v204 = vand.u32 2147483647, %v184
  %v205 = vand.u32 2147483647, %v187
  %v206 = vsub.f32 0.0, %v190
  %v207 = vsub.f32 0.0, %v191
  %v208 = vsub.f32 0.0, %v192
  %v209 = vsub.f32 0.0, %v193
  %v210 = vsub.f32 0.0, %v194
  %v211 = vsub.f32 0.0, %v195
  %v212 = vsub.f32 0.0, %v196
  %v213 = vsub.f32 0.0, %v197
  %v214 = vsub.f32 0.0, %v198
  %v215 = vsub.f32 0.0, %v199
  %v216 = vsub.f32 0.0, %v200
  %v217 = vsub.f32 0.0, %v201
  %v218 = vsub.f32 0.0, %v202
  %v219 = vsub.f32 0.0, %v203
  %v220 = vsub.f32 0.0, %v204
  %v221 = vsub.f32 0.0, %v205
  %v222 = vmul.f32 %v206, 1.442695
  %v223 = vpow.pop %v222
  %v224 = vmul.f32 %v207, 1.442695
  %v225 = vpow.pop %v224
  %v226 = vmul.f32 %v208, 1.442695
  %v227 = vpow.pop %v226
  %v228 = vmul.f32 %v209, 1.442695
  %v229 = vpow.pop %v228
  %v230 = vmul.f32 %v210, 1.442695
  %v231 = vpow.pop %v230
  %v232 = vmul.f32 %v211, 1.442695
  %v233 = vpow.pop %v232
  %v234 = vmul.f32 %v212, 1.442695
  %v235 = vpow.pop %v234
  %v236 = vmul.f32 %v213, 1.442695
  %v237 = vpow.pop %v236
  %v238 = vmul.f32 %v214, 1.442695
  %v239 = vpow.pop %v238
  %v240 = vmul.f32 %v215, 1.442695
  %v241 = vpow.pop %v240
  %v242 = vmul.f32 %v216, 1.442695
  %v243 = vpow.pop %v242
  %v244 = vmul.f32 %v217, 1.442695
  %v245 = vpow.pop %v244
  %v246 = vmul.f32 %v218, 1.442695
  %v247 = vpow.pop %v246
  %v248 = vmul.f32 %v219, 1.442695
  %v249 = vpow.pop %v248
  %v250 = vmul.f32 %v220, 1.442695
  %v251 = vpow.pop %v250
  %v252 = vmul.f32 %v221, 1.442695
  %v253 = vpow.pop %v252
  %v254 = vadd.f32 %v223, 1.0
  %v255 = vadd.f32 %v225, 1.0
  %v256 = vadd.f32 %v227, 1.0
  %v257 = vadd.f32 %v229, 1.0
  %v258 = vadd.f32 %v231, 1.0
  %v259 = vadd.f32 %v233, 1.0
  %v260 = vadd.f32 %v235, 1.0
  %v261 = vadd.f32 %v237, 1.0
  %v262 = vadd.f32 %v239, 1.0
  %v263 = vadd.f32 %v241, 1.0
  %v264 = vadd.f32 %v243, 1.0
  %v265 = vadd.f32 %v245, 1.0
  %v266 = vadd.f32 %v247, 1.0
  %v267 = vadd.f32 %v249, 1.0
  %v268 = vadd.f32 %v251, 1.0
  %v269 = vadd.f32 %v253, 1.0
  %v270 = vrcp.pop %v254
  %v271 = vrcp.pop %v255
  %v272 = vrcp.pop %v256
  %v273 = vrcp.pop %v257
  %v274 = vrcp.pop %v258
  %v275 = vrcp.pop %v259
  %v276 = vrcp.pop %v260
  %v277 = vrcp.pop %v261
  %v278 = vrcp.pop %v262
  %v279 = vrcp.pop %v263
  %v280 = vrcp.pop %v264
  %v281 = vrcp.pop %v265
  %v282 = vrcp.pop %v266
  %v283 = vrcp.pop %v267
  %v284 = vrcp.pop %v268
  %v285 = vrcp.pop %v269
  %vm286 = vcmp.ge.f32.partialorder %v128, 0.0
  %vm287 = vcmp.ge.f32.partialorder %v131, 0.0
  %vm288 = vcmp.ge.f32.partialorder %v136, 0.0
  %vm289 = vcmp.ge.f32.partialorder %v139, 0.0
  %vm290 = vcmp.ge.f32.partialorder %v144, 0.0
  %vm291 = vcmp.ge.f32.partialorder %v147, 0.0
  %vm292 = vcmp.ge.f32.partialorder %v152, 0.0
  %vm293 = vcmp.ge.f32.partialorder %v155, 0.0
  %vm294 = vcmp.ge.f32.partialorder %v160, 0.0
  %vm295 = vcmp.ge.f32.partialorder %v163, 0.0
  %vm296 = vcmp.ge.f32.partialorder %v168, 0.0
  %vm297 = vcmp.ge.f32.partialorder %v171, 0.0
  %vm298 = vcmp.ge.f32.partialorder %v176, 0.0
  %vm299 = vcmp.ge.f32.partialorder %v179, 0.0
  %vm300 = vcmp.ge.f32.partialorder %v184, 0.0
  %vm301 = vcmp.ge.f32.partialorder %v187, 0.0
  %v302 = vmul.f32 %v223, %v270
  %v303 = vmul.f32 %v225, %v271
  %v304 = vmul.f32 %v227, %v272
  %v305 = vmul.f32 %v229, %v273
  %v306 = vmul.f32 %v231, %v274
  %v307 = vmul.f32 %v233, %v275
  %v308 = vmul.f32 %v235, %v276
  %v309 = vmul.f32 %v237, %v277
  %v310 = vmul.f32 %v239, %v278
  %v311 = vmul.f32 %v241, %v279
  %v312 = vmul.f32 %v243, %v280
  %v313 = vmul.f32 %v245, %v281
  %v314 = vmul.f32 %v247, %v282
  %v315 = vmul.f32 %v249, %v283
  %v316 = vmul.f32 %v251, %v284
  %v317 = vmul.f32 %v253, %v285
  %v318 = vsel %vm286, %v270, %v302
  %v319 = vsel %vm287, %v271, %v303
  %v320 = vsel %vm288, %v272, %v304
  %v321 = vsel %vm289, %v273, %v305
  %v322 = vsel %vm290, %v274, %v306
  %v323 = vsel %vm291, %v275, %v307
  %v324 = vsel %vm292, %v276, %v308
  %v325 = vsel %vm293, %v277, %v309
  %v326 = vsel %vm294, %v278, %v310
  %v327 = vsel %vm295, %v279, %v311
  %v328 = vsel %vm296, %v280, %v312
  %v329 = vsel %vm297, %v281, %v313
  %v330 = vsel %vm298, %v282, %v314
  %v331 = vsel %vm299, %v283, %v315
  %v332 = vsel %vm300, %v284, %v316
  %v333 = vsel %vm301, %v285, %v317
  %v334 = vmul.f32 %v128, %v318
  %v335 = vmul.f32 %v131, %v319
  %v336 = vmul.f32 %v136, %v320
  %v337 = vmul.f32 %v139, %v321
  %v338 = vmul.f32 %v144, %v322
  %v339 = vmul.f32 %v147, %v323
  %v340 = vmul.f32 %v152, %v324
  %v341 = vmul.f32 %v155, %v325
  %v342 = vmul.f32 %v160, %v326
  %v343 = vmul.f32 %v163, %v327
  %v344 = vmul.f32 %v168, %v328
  %v345 = vmul.f32 %v171, %v329
  %v346 = vmul.f32 %v176, %v330
  %v347 = vmul.f32 %v179, %v331
  %v348 = vmul.f32 %v184, %v332
  %v349 = vmul.f32 %v187, %v333
  %v350 = vpack.c.bf16 %v335, %v334
  %v351 = vpack.c.bf16 %v337, %v336
  %v352 = vpack.c.bf16 %v339, %v338
  %v353 = vpack.c.bf16 %v341, %v340
  %v354 = vpack.c.bf16 %v343, %v342
  %v355 = vpack.c.bf16 %v345, %v344
  %v356 = vpack.c.bf16 %v347, %v346
  %v357 = vpack.c.bf16 %v349, %v348
  %v366 = vunpack.c.l.b16 %v350
  %v367 = vunpack.c.h.b16 %v350
  %v368 = vunpack.c.l.b16 %v351
  %v369 = vunpack.c.h.b16 %v351
  %v370 = vunpack.c.l.b16 %v352
  %v371 = vunpack.c.h.b16 %v352
  %v372 = vunpack.c.l.b16 %v353
  %v373 = vunpack.c.h.b16 %v353
  %v374 = vunpack.c.l.b16 %v354
  %v375 = vunpack.c.h.b16 %v354
  %v376 = vunpack.c.l.b16 %v355
  %v377 = vunpack.c.h.b16 %v355
  %v378 = vunpack.c.l.b16 %v356
  %v379 = vunpack.c.h.b16 %v356
  %v380 = vunpack.c.l.b16 %v357
  %v381 = vunpack.c.h.b16 %v357
  %v382 = vpack.c.b16 %v366, %v366
  %v383 = vpack.c.b16 %v367, %v367
  %v384 = vpack.c.b16 %v368, %v368
  %v385 = vpack.c.b16 %v369, %v369
  %v386 = vpack.c.b16 %v370, %v370
  %v387 = vpack.c.b16 %v371, %v371
  %v388 = vpack.c.b16 %v372, %v372
  %v389 = vpack.c.b16 %v373, %v373
  %v390 = vpack.c.b16 %v374, %v374
  %v391 = vpack.c.b16 %v375, %v375
  %v392 = vpack.c.b16 %v376, %v376
  %v393 = vpack.c.b16 %v377, %v377
  %v394 = vpack.c.b16 %v378, %v378
  %v395 = vpack.c.b16 %v379, %v379
  %v396 = vpack.c.b16 %v380, %v380
  %v397 = vpack.c.b16 %v381, %v381
  %vm414 = vcmask 257024
  %415 = vst.msk [vmem:[%s3] sm:$0xf] %vm414, %v382
  %416 = vst.msk [vmem:[%s3 + $0x4] sm:$0xf] %vm414, %v383
  %417 = vst.msk [vmem:[%s3 + $0x8] sm:$0xf] %vm414, %v384
  %418 = vst.msk [vmem:[%s3 + $0xc] sm:$0xf] %vm414, %v385
  %419 = vst.msk [vmem:[%s3 + $0x10] sm:$0xf] %vm414, %v386
  %420 = vst.msk [vmem:[%s3 + $0x14] sm:$0xf] %vm414, %v387
  %421 = vst.msk [vmem:[%s3 + $0x18] sm:$0xf] %vm414, %v388
  %422 = vst.msk [vmem:[%s3 + $0x1c] sm:$0xf] %vm414, %v389
  %423 = vst.msk [vmem:[%s3 + $0x20] sm:$0xf] %vm414, %v390
  %424 = vst.msk [vmem:[%s3 + $0x24] sm:$0xf] %vm414, %v391
  %425 = vst.msk [vmem:[%s3 + $0x28] sm:$0xf] %vm414, %v392
  %426 = vst.msk [vmem:[%s3 + $0x2c] sm:$0xf] %vm414, %v393
  %427 = vst.msk [vmem:[%s3 + $0x30] sm:$0xf] %vm414, %v394
  %428 = vst.msk [vmem:[%s3 + $0x34] sm:$0xf] %vm414, %v395
  %429 = vst.msk [vmem:[%s3 + $0x38] sm:$0xf] %vm414, %v396
  %430 = vst.msk [vmem:[%s3 + $0x3c] sm:$0xf] %vm414, %v397
  // Predicated region
  $region14: #{tpu_custom_call.1} parent=0 // pred_check
    _
  $region15: #{tpu_custom_call.1} parent=0 // pred_check_branch
    %432 = sbr.rel (0) target = $region17
  $region16: #{tpu_custom_call.1} parent=0 // pred_region
    _
  $region17: #{tpu_custom_call.1} parent=0 // pred_fallthru
    _
  // Predicated region
  $region18: #{tpu_custom_call.1} parent=0 // pred_check
    _
  $region19: #{tpu_custom_call.1} parent=0 // pred_check_branch
    %434 = sbr.rel (0) target = $region21
  $region20: #{tpu_custom_call.1} parent=0 // pred_region
    _
  $region21: #{tpu_custom_call.1} parent=0 // pred_fallthru
    _

</llo_original>
